<compile_context>
chip_gen: v7x
topology: tpu7x:2x2x1
jax: 0.10.0
libtpu: 0.0.40
codegen_flags: <defaults>
</compile_context>

<pallas_src>
import functools

import jax
import jax.numpy as jnp
from jax.experimental import pallas as pl
from jax.experimental.pallas import tpu as pltpu


def _decoder_kernel(xt_ref, w_ref, g_ref, b_ref, o_ref, *,
                    n_phases, co, count, eps, neg_slope):
    """Fused sub-pixel ConvTranspose2d + BatchNorm2d(train) + LeakyReLU.

    xt_ref: [K, M]            bf16  shared im2col slab (K = taps*CI, M = N*QH*QW)
    w_ref : [n_phases, CO, K] bf16  per-output-phase weight matrices
    g_ref : [CO, 1]           f32   BatchNorm gamma
    b_ref : [CO, 1]           f32   BatchNorm beta
    o_ref : [n_phases*CO, M]  f32   phase/channel-major output (lane-dense)
    """
    xt = xt_ref[...]                                            # [K, M] bf16

    # --- transposed conv: one MXU matmul per sub-pixel output phase ---------
    ys = []
    for ph in range(n_phases):
        ys.append(jnp.dot(w_ref[ph], xt,
                          preferred_element_type=jnp.float32))  # [CO, M] f32

    # --- BatchNorm2d, training mode, single pass (E[x^2] - E[x]^2 in f32) ---
    ch_sum = jnp.zeros((co, 1), jnp.float32)
    ch_sumsq = jnp.zeros((co, 1), jnp.float32)
    for y in ys:
        ch_sum = ch_sum + jnp.sum(y, axis=1, keepdims=True)
        ch_sumsq = ch_sumsq + jnp.sum(y * y, axis=1, keepdims=True)
    inv_count = 1.0 / count
    mean = ch_sum * inv_count                                   # [CO, 1]
    var = jnp.maximum(ch_sumsq * inv_count - mean * mean, 0.0)  # [CO, 1]
    scale = g_ref[...] * jax.lax.rsqrt(var + eps)               # [CO, 1]
    shift = b_ref[...] - mean * scale                           # [CO, 1]

    # --- normalize + LeakyReLU, lane-dense stores ---------------------------
    for ph in range(n_phases):
        z = ys[ph] * scale + shift
        z = jnp.where(z >= 0, z, neg_slope * z)
        o_ref[ph * co:(ph + 1) * co, :] = z.astype(o_ref.dtype)


def decoder_forward(x_nchw, w_t, bias, gamma, beta, *,
                    stride, padding, output_padding, eps=1e-5, neg_slope=0.01):
    """Forward pass of Decoder (complex=False).

    x_nchw: [N, CI, IH, IW] float32
    w_t   : PyTorch ConvTranspose2d weight, layout [CI, CO, KH, KW]
    bias  : [CO]  (unused: a per-channel constant before training-mode BN is
                   absorbed exactly by the batch mean)
    gamma, beta : BatchNorm2d affine parameters, [CO]
    Returns [N, CO, OH, OW] float32 (NCHW, matching the PyTorch module).
    """
    del bias  # absorbed by the batch-norm mean (mathematically a no-op)

    N, CI, IH, IW = x_nchw.shape
    _, CO, KH, KW = w_t.shape
    sh, sw = stride
    pad_h, pad_w = padding
    oph, opw = output_padding

    OH = (IH - 1) * sh - 2 * pad_h + KH + oph
    OW = (IW - 1) * sw - 2 * pad_w + KW + opw
    if OH % sh != 0 or OW % sw != 0:
        # TODO(synk): support ragged phases (OH/OW not divisible by stride):
        # needs a validity mask in the BN statistics and a final slice.
        raise NotImplementedError("decoder_forward requires OH%sh==0, OW%sw==0")
    QH, QW = OH // sh, OW // sw
    M = N * QH * QW
    n_phases = sh * sw

    # --- sub-pixel decomposition tables (trace-time Python) -----------------
    # Output row oh = q*sh + a receives kernel taps kh with
    # (a + pad_h - kh) % sh == 0, reading input row q + dr where
    # dr = (a + pad_h - kh) // sh.  (Same for columns.)
    row_taps = {a: [(kh, (a + pad_h - kh) // sh)
                    for kh in range(KH) if (a + pad_h - kh) % sh == 0]
                for a in range(sh)}
    col_taps = {b: [(kw, (b + pad_w - kw) // sw)
                    for kw in range(KW) if (b + pad_w - kw) % sw == 0]
                for b in range(sw)}
    dr_vals = sorted({dr for a in range(sh) for _, dr in row_taps[a]})
    dc_vals = sorted({dc for b in range(sw) for _, dc in col_taps[b]})
    DR, DC = len(dr_vals), len(dc_vals)
    dr_idx = {d: i for i, d in enumerate(dr_vals)}
    dc_idx = {d: i for i, d in enumerate(dc_vals)}
    K = DR * DC * CI

    pad_t = max(0, -dr_vals[0])
    pad_b = max(0, (QH - 1) + dr_vals[-1] - (IH - 1))
    pad_l = max(0, -dc_vals[0])
    pad_r = max(0, (QW - 1) + dc_vals[-1] - (IW - 1))

    # --- shared bf16 im2col slab: xt[(dri,dci,ci), (n,q,c)] ------------------
    x = x_nchw.astype(jnp.bfloat16)
    xpad = jnp.pad(x, ((0, 0), (0, 0), (pad_t, pad_b), (pad_l, pad_r)))
    slabs = []
    for dr in dr_vals:
        for dc in dc_vals:
            sl = xpad[:, :, dr + pad_t: dr + pad_t + QH,
                      dc + pad_l: dc + pad_l + QW]               # [N, CI, QH, QW]
            slabs.append(jnp.transpose(sl, (1, 0, 2, 3)).reshape(CI, M))
    xt = jnp.concatenate(slabs, axis=0)                          # [K, M] bf16

    # --- per-phase weight matrices [n_phases, CO, K] (zeros on unused taps) --
    wstack = jnp.zeros((n_phases, CO, K), jnp.float32)
    for a in range(sh):
        for kh, dr in row_taps[a]:
            for b in range(sw):
                for kw, dc in col_taps[b]:
                    c0 = (dr_idx[dr] * DC + dc_idx[dc]) * CI
                    wstack = wstack.at[a * sw + b, :, c0:c0 + CI].set(
                        jnp.transpose(w_t[:, :, kh, kw]))
    wstack = wstack.astype(jnp.bfloat16)

    g2 = gamma.reshape(CO, 1).astype(jnp.float32)
    b2 = beta.reshape(CO, 1).astype(jnp.float32)

    kernel = functools.partial(
        _decoder_kernel, n_phases=n_phases, co=CO,
        count=float(N * OH * OW), eps=eps, neg_slope=neg_slope)

    out_rows = n_phases * CO
    grid_spec = pl.GridSpec(
        grid=(1,),
        in_specs=[
            pl.BlockSpec(xt.shape, lambda i: (0, 0)),
            pl.BlockSpec(wstack.shape, lambda i: (0, 0, 0)),
            pl.BlockSpec((CO, 1), lambda i: (0, 0)),
            pl.BlockSpec((CO, 1), lambda i: (0, 0)),
        ],
        out_specs=pl.BlockSpec((out_rows, M), lambda i: (0, 0)),
    )
    out_flat = pl.pallas_call(
        kernel,
        out_shape=jax.ShapeDtypeStruct((out_rows, M), jnp.float32),
        grid_spec=grid_spec,
        compiler_params=pltpu.CompilerParams(
            dimension_semantics=("arbitrary",)),
    )(xt, wstack, g2, b2)

    # [(a,b,co), (n,q,c)] -> NCHW directly (no NHWC intermediate).
    out = out_flat.reshape(sh, sw, CO, N, QH, QW)
    out = jnp.transpose(out, (3, 2, 4, 0, 5, 1)).reshape(N, CO, OH, OW)
    return out


def _reference_decoder(x_nchw, w_t, bias, gamma, beta, *,
                       stride, padding, output_padding, eps=1e-5, neg_slope=0.01):
    """Pure-JAX f32 reference (dilate + pad + flipped-kernel stride-1 conv)."""
    N, CI, IH, IW = x_nchw.shape
    _, CO, KH, KW = w_t.shape
    sh, sw = stride
    pad_h, pad_w = padding
    oph, opw = output_padding
    OH = (IH - 1) * sh - 2 * pad_h + KH + oph
    OW = (IW - 1) * sw - 2 * pad_w + KW + opw

    x = jnp.transpose(x_nchw, (0, 2, 3, 1)).astype(jnp.float32)     # NHWC
    xdil = jnp.zeros((N, (IH - 1) * sh + 1, (IW - 1) * sw + 1, CI), jnp.float32)
    xdil = xdil.at[:, ::sh, ::sw, :].set(x)
    xpad = jnp.pad(xdil, ((0, 0),
                          (KH - 1 - pad_h, KH - 1 - pad_h + oph),
                          (KW - 1 - pad_w, KW - 1 - pad_w + opw),
                          (0, 0)))
    wflip = jnp.transpose(w_t[:, :, ::-1, ::-1], (2, 3, 0, 1)).astype(jnp.float32)
    acc = jnp.zeros((N, OH, OW, CO), jnp.float32)
    for kh in range(KH):
        for kw in range(KW):
            acc = acc + jnp.einsum("nhwc,cd->nhwd",
                                   xpad[:, kh:kh + OH, kw:kw + OW, :],
                                   wflip[kh, kw])
    acc = acc + bias[None, None, None, :]
    mean = jnp.mean(acc, axis=(0, 1, 2), keepdims=True)
    var = jnp.mean((acc - mean) ** 2, axis=(0, 1, 2), keepdims=True)
    y = (acc - mean) * jax.lax.rsqrt(var + eps)
    y = y * gamma[None, None, None, :] + beta[None, None, None, :]
    y = jnp.where(y >= 0, y, neg_slope * y)
    return jnp.transpose(y, (0, 3, 1, 2))


if __name__ == "__main__":
    # Decoder(in_channels=4, out_channels=8, kernel_size=(3,3), stride=(2,2),
    #         output_padding=(1,1), padding=(1,1), complex=False)
    N, CI, IH, IW = 2, 4, 16, 16
    CO, KH, KW = 8, 3, 3
    stride, padding, output_padding = (2, 2), (1, 1), (1, 1)

    key = jax.random.PRNGKey(0)
    kx, kw_, kb, kg, kbt = jax.random.split(key, 5)

    x = jax.random.normal(kx, (N, CI, IH, IW), jnp.float32)

    # ConvTranspose2d params (PyTorch weight layout [CI, CO, KH, KW]),
    # deterministic uniform init ~ U(-bound, bound), bound = 1/sqrt(fan).
    fan = CI * KH * KW
    bound = 1.0 / (fan ** 0.5)
    w_t = jax.random.uniform(kw_, (CI, CO, KH, KW), jnp.float32, -bound, bound)
    bias = jax.random.uniform(kb, (CO,), jnp.float32, -bound, bound)

    # BatchNorm2d affine params (perturbed from the default 1/0 init so the
    # affine path is actually exercised).
    gamma = 1.0 + 0.1 * jax.random.normal(kg, (CO,), jnp.float32)
    beta = 0.1 * jax.random.normal(kbt, (CO,), jnp.float32)

    out = decoder_forward(x, w_t, bias, gamma, beta,
                          stride=stride, padding=padding,
                          output_padding=output_padding)
    out = jax.block_until_ready(out)

    expected_shape = (N, CO, 2 * IH, 2 * IW)
    assert out.shape == expected_shape, (out.shape, expected_shape)
    assert bool(jnp.all(jnp.isfinite(out)))

    # Correctness check vs. the pure-JAX f32 reference (kernel conv runs with
    # bf16 operands, so use a loose-but-bug-catching absolute tolerance).
    ref = _reference_decoder(x, w_t, bias, gamma, beta,
                             stride=stride, padding=padding,
                             output_padding=output_padding)
    max_err = float(jnp.max(jnp.abs(out - ref)))
    assert max_err < 0.15, max_err

    print("KERNEL_OK")
</pallas_src>

<mosaic_0001>
module attributes {stable_mosaic.version = 11 : i64} {
  func.func @_decoder_kernel(%arg0: i32, %arg1: memref<16x512xbf16, #tpu.memory_space<vmem>>, %arg2: memref<4x8x16xbf16, #tpu.memory_space<vmem>>, %arg3: memref<8x1xf32, #tpu.memory_space<vmem>>, %arg4: memref<8x1xf32, #tpu.memory_space<vmem>>, %arg5: memref<32x512xf32, #tpu.memory_space<vmem>>) attributes {dimension_semantics = [#tpu.dimension_semantics<arbitrary>], iteration_bounds = array<i64: 1>, scalar_prefetch = 0 : i64, scratch_operands = 0 : i64, tpu.core_type = #tpu.core_type<tc>, window_params = [{pipeline_mode = #tpu.pipeline_mode<synchronous>, transform_indices = @transform_0, window_bounds = array<i64: 16, 512>}, {pipeline_mode = #tpu.pipeline_mode<synchronous>, transform_indices = @transform_1, window_bounds = array<i64: 4, 8, 16>}, {pipeline_mode = #tpu.pipeline_mode<synchronous>, transform_indices = @transform_2, window_bounds = array<i64: 8, 1>}, {pipeline_mode = #tpu.pipeline_mode<synchronous>, transform_indices = @transform_3, window_bounds = array<i64: 8, 1>}, {pipeline_mode = #tpu.pipeline_mode<synchronous>, transform_indices = @transform_4, window_bounds = array<i64: 32, 512>}]} {
    %c0 = arith.constant 0 : index
    %c0_0 = arith.constant 0 : index
    %0 = vector.load %arg1[%c0, %c0_0] : memref<16x512xbf16, #tpu.memory_space<vmem>>, vector<16x512xbf16>
    %c0_1 = arith.constant 0 : index
    %c0_2 = arith.constant 0 : index
    %c0_3 = arith.constant 0 : index
    %1 = vector.load %arg2[%c0_1, %c0_2, %c0_3] : memref<4x8x16xbf16, #tpu.memory_space<vmem>>, vector<1x8x16xbf16>
    %2 = vector.shape_cast %1 : vector<1x8x16xbf16> to vector<8x16xbf16>
    %cst = arith.constant dense<0.000000e+00> : vector<8x512xf32>
    %3 = tpu.matmul %2, %0, %cst {dimension_numbers = #tpu.dot_dimension_numbers<[1], [0], [0], [1], [0, 0, 1, 1], [], []>} : vector<8x16xbf16>, vector<16x512xbf16>, vector<8x512xf32> -> vector<8x512xf32>
    %c1 = arith.constant 1 : index
    %c0_4 = arith.constant 0 : index
    %c0_5 = arith.constant 0 : index
    %4 = vector.load %arg2[%c1, %c0_4, %c0_5] : memref<4x8x16xbf16, #tpu.memory_space<vmem>>, vector<1x8x16xbf16>
    %5 = vector.shape_cast %4 : vector<1x8x16xbf16> to vector<8x16xbf16>
    %cst_6 = arith.constant dense<0.000000e+00> : vector<8x512xf32>
    %6 = tpu.matmul %5, %0, %cst_6 {dimension_numbers = #tpu.dot_dimension_numbers<[1], [0], [0], [1], [0, 0, 1, 1], [], []>} : vector<8x16xbf16>, vector<16x512xbf16>, vector<8x512xf32> -> vector<8x512xf32>
    %c2 = arith.constant 2 : index
    %c0_7 = arith.constant 0 : index
    %c0_8 = arith.constant 0 : index
    %7 = vector.load %arg2[%c2, %c0_7, %c0_8] : memref<4x8x16xbf16, #tpu.memory_space<vmem>>, vector<1x8x16xbf16>
    %8 = vector.shape_cast %7 : vector<1x8x16xbf16> to vector<8x16xbf16>
    %cst_9 = arith.constant dense<0.000000e+00> : vector<8x512xf32>
    %9 = tpu.matmul %8, %0, %cst_9 {dimension_numbers = #tpu.dot_dimension_numbers<[1], [0], [0], [1], [0, 0, 1, 1], [], []>} : vector<8x16xbf16>, vector<16x512xbf16>, vector<8x512xf32> -> vector<8x512xf32>
    %c3 = arith.constant 3 : index
    %c0_10 = arith.constant 0 : index
    %c0_11 = arith.constant 0 : index
    %10 = vector.load %arg2[%c3, %c0_10, %c0_11] : memref<4x8x16xbf16, #tpu.memory_space<vmem>>, vector<1x8x16xbf16>
    %11 = vector.shape_cast %10 : vector<1x8x16xbf16> to vector<8x16xbf16>
    %cst_12 = arith.constant dense<0.000000e+00> : vector<8x512xf32>
    %12 = tpu.matmul %11, %0, %cst_12 {dimension_numbers = #tpu.dot_dimension_numbers<[1], [0], [0], [1], [0, 0, 1, 1], [], []>} : vector<8x16xbf16>, vector<16x512xbf16>, vector<8x512xf32> -> vector<8x512xf32>
    %cst_13 = arith.constant 0.000000e+00 : f32
    %13 = vector.broadcast %cst_13 : f32 to vector<8x1xf32>
    %cst_14 = arith.constant 0.000000e+00 : f32
    %14 = vector.broadcast %cst_14 : f32 to vector<8x1xf32>
    %cst_15 = arith.constant dense<0.000000e+00> : vector<8xf32>
    %15 = vector.multi_reduction <add>, %3, %cst_15 [1] : vector<8x512xf32> to vector<8xf32>
    %16 = vector.shape_cast %15 : vector<8xf32> to vector<8x1xf32>
    %17 = arith.addf %13, %16 : vector<8x1xf32>
    %18 = arith.mulf %3, %3 : vector<8x512xf32>
    %cst_16 = arith.constant dense<0.000000e+00> : vector<8xf32>
    %19 = vector.multi_reduction <add>, %18, %cst_16 [1] : vector<8x512xf32> to vector<8xf32>
    %20 = vector.shape_cast %19 : vector<8xf32> to vector<8x1xf32>
    %21 = arith.addf %14, %20 : vector<8x1xf32>
    %cst_17 = arith.constant dense<0.000000e+00> : vector<8xf32>
    %22 = vector.multi_reduction <add>, %6, %cst_17 [1] : vector<8x512xf32> to vector<8xf32>
    %23 = vector.shape_cast %22 : vector<8xf32> to vector<8x1xf32>
    %24 = arith.addf %17, %23 : vector<8x1xf32>
    %25 = arith.mulf %6, %6 : vector<8x512xf32>
    %cst_18 = arith.constant dense<0.000000e+00> : vector<8xf32>
    %26 = vector.multi_reduction <add>, %25, %cst_18 [1] : vector<8x512xf32> to vector<8xf32>
    %27 = vector.shape_cast %26 : vector<8xf32> to vector<8x1xf32>
    %28 = arith.addf %21, %27 : vector<8x1xf32>
    %cst_19 = arith.constant dense<0.000000e+00> : vector<8xf32>
    %29 = vector.multi_reduction <add>, %9, %cst_19 [1] : vector<8x512xf32> to vector<8xf32>
    %30 = vector.shape_cast %29 : vector<8xf32> to vector<8x1xf32>
    %31 = arith.addf %24, %30 : vector<8x1xf32>
    %32 = arith.mulf %9, %9 : vector<8x512xf32>
    %cst_20 = arith.constant dense<0.000000e+00> : vector<8xf32>
    %33 = vector.multi_reduction <add>, %32, %cst_20 [1] : vector<8x512xf32> to vector<8xf32>
    %34 = vector.shape_cast %33 : vector<8xf32> to vector<8x1xf32>
    %35 = arith.addf %28, %34 : vector<8x1xf32>
    %cst_21 = arith.constant dense<0.000000e+00> : vector<8xf32>
    %36 = vector.multi_reduction <add>, %12, %cst_21 [1] : vector<8x512xf32> to vector<8xf32>
    %37 = vector.shape_cast %36 : vector<8xf32> to vector<8x1xf32>
    %38 = arith.addf %31, %37 : vector<8x1xf32>
    %39 = arith.mulf %12, %12 : vector<8x512xf32>
    %cst_22 = arith.constant dense<0.000000e+00> : vector<8xf32>
    %40 = vector.multi_reduction <add>, %39, %cst_22 [1] : vector<8x512xf32> to vector<8xf32>
    %41 = vector.shape_cast %40 : vector<8xf32> to vector<8x1xf32>
    %42 = arith.addf %35, %41 : vector<8x1xf32>
    %cst_23 = arith.constant 4.8828125E-4 : f32
    %43 = vector.broadcast %cst_23 : f32 to vector<8x1xf32>
    %44 = arith.mulf %38, %43 : vector<8x1xf32>
    %cst_24 = arith.constant 4.8828125E-4 : f32
    %45 = vector.broadcast %cst_24 : f32 to vector<8x1xf32>
    %46 = arith.mulf %42, %45 : vector<8x1xf32>
    %47 = arith.mulf %44, %44 : vector<8x1xf32>
    %48 = arith.subf %46, %47 : vector<8x1xf32>
    %cst_25 = arith.constant 0.000000e+00 : f32
    %49 = vector.broadcast %cst_25 : f32 to vector<8x1xf32>
    %50 = arith.maximumf %48, %49 : vector<8x1xf32>
    %c0_26 = arith.constant 0 : index
    %c0_27 = arith.constant 0 : index
    %51 = vector.load %arg3[%c0_26, %c0_27] : memref<8x1xf32, #tpu.memory_space<vmem>>, vector<8x1xf32>
    %cst_28 = arith.constant 9.99999974E-6 : f32
    %52 = vector.broadcast %cst_28 : f32 to vector<8x1xf32>
    %53 = arith.addf %50, %52 : vector<8x1xf32>
    %54 = math.rsqrt %53 : vector<8x1xf32>
    %55 = arith.mulf %51, %54 : vector<8x1xf32>
    %c0_29 = arith.constant 0 : index
    %c0_30 = arith.constant 0 : index
    %56 = vector.load %arg4[%c0_29, %c0_30] : memref<8x1xf32, #tpu.memory_space<vmem>>, vector<8x1xf32>
    %57 = arith.mulf %44, %55 : vector<8x1xf32>
    %58 = arith.subf %56, %57 : vector<8x1xf32>
    %59 = vector.broadcast %55 : vector<8x1xf32> to vector<8x512xf32>
    %60 = arith.mulf %3, %59 : vector<8x512xf32>
    %61 = vector.broadcast %58 : vector<8x1xf32> to vector<8x512xf32>
    %62 = arith.addf %60, %61 : vector<8x512xf32>
    %cst_31 = arith.constant 0.000000e+00 : f32
    %63 = vector.broadcast %cst_31 : f32 to vector<8x512xf32>
    %64 = arith.cmpf oge, %62, %63 : vector<8x512xf32>
    %cst_32 = arith.constant 0.00999999977 : f32
    %65 = vector.broadcast %cst_32 : f32 to vector<8x512xf32>
    %66 = arith.mulf %65, %62 : vector<8x512xf32>
    %67 = arith.select %64, %62, %66 : vector<8x512xi1>, vector<8x512xf32>
    %c0_33 = arith.constant 0 : index
    %c0_34 = arith.constant 0 : index
    %68 = vector.load %arg5[%c0_33, %c0_34] : memref<32x512xf32, #tpu.memory_space<vmem>>, vector<8x512xf32>
    tpu.vector_store %arg5[%c0_33, %c0_34], %67 {strides = array<i32>} : memref<32x512xf32, #tpu.memory_space<vmem>>, vector<8x512xf32>,
    %69 = vector.broadcast %55 : vector<8x1xf32> to vector<8x512xf32>
    %70 = arith.mulf %6, %69 : vector<8x512xf32>
    %71 = vector.broadcast %58 : vector<8x1xf32> to vector<8x512xf32>
    %72 = arith.addf %70, %71 : vector<8x512xf32>
    %cst_35 = arith.constant 0.000000e+00 : f32
    %73 = vector.broadcast %cst_35 : f32 to vector<8x512xf32>
    %74 = arith.cmpf oge, %72, %73 : vector<8x512xf32>
    %cst_36 = arith.constant 0.00999999977 : f32
    %75 = vector.broadcast %cst_36 : f32 to vector<8x512xf32>
    %76 = arith.mulf %75, %72 : vector<8x512xf32>
    %77 = arith.select %74, %72, %76 : vector<8x512xi1>, vector<8x512xf32>
    %c8 = arith.constant 8 : index
    %c0_37 = arith.constant 0 : index
    %78 = vector.load %arg5[%c8, %c0_37] : memref<32x512xf32, #tpu.memory_space<vmem>>, vector<8x512xf32>
    tpu.vector_store %arg5[%c8, %c0_37], %77 {strides = array<i32>} : memref<32x512xf32, #tpu.memory_space<vmem>>, vector<8x512xf32>,
    %79 = vector.broadcast %55 : vector<8x1xf32> to vector<8x512xf32>
    %80 = arith.mulf %9, %79 : vector<8x512xf32>
    %81 = vector.broadcast %58 : vector<8x1xf32> to vector<8x512xf32>
    %82 = arith.addf %80, %81 : vector<8x512xf32>
    %cst_38 = arith.constant 0.000000e+00 : f32
    %83 = vector.broadcast %cst_38 : f32 to vector<8x512xf32>
    %84 = arith.cmpf oge, %82, %83 : vector<8x512xf32>
    %cst_39 = arith.constant 0.00999999977 : f32
    %85 = vector.broadcast %cst_39 : f32 to vector<8x512xf32>
    %86 = arith.mulf %85, %82 : vector<8x512xf32>
    %87 = arith.select %84, %82, %86 : vector<8x512xi1>, vector<8x512xf32>
    %c16 = arith.constant 16 : index
    %c0_40 = arith.constant 0 : index
    %88 = vector.load %arg5[%c16, %c0_40] : memref<32x512xf32, #tpu.memory_space<vmem>>, vector<8x512xf32>
    tpu.vector_store %arg5[%c16, %c0_40], %87 {strides = array<i32>} : memref<32x512xf32, #tpu.memory_space<vmem>>, vector<8x512xf32>,
    %89 = vector.broadcast %55 : vector<8x1xf32> to vector<8x512xf32>
    %90 = arith.mulf %12, %89 : vector<8x512xf32>
    %91 = vector.broadcast %58 : vector<8x1xf32> to vector<8x512xf32>
    %92 = arith.addf %90, %91 : vector<8x512xf32>
    %cst_41 = arith.constant 0.000000e+00 : f32
    %93 = vector.broadcast %cst_41 : f32 to vector<8x512xf32>
    %94 = arith.cmpf oge, %92, %93 : vector<8x512xf32>
    %cst_42 = arith.constant 0.00999999977 : f32
    %95 = vector.broadcast %cst_42 : f32 to vector<8x512xf32>
    %96 = arith.mulf %95, %92 : vector<8x512xf32>
    %97 = arith.select %94, %92, %96 : vector<8x512xi1>, vector<8x512xf32>
    %c24 = arith.constant 24 : index
    %c0_43 = arith.constant 0 : index
    %98 = vector.load %arg5[%c24, %c0_43] : memref<32x512xf32, #tpu.memory_space<vmem>>, vector<8x512xf32>
    tpu.vector_store %arg5[%c24, %c0_43], %97 {strides = array<i32>} : memref<32x512xf32, #tpu.memory_space<vmem>>, vector<8x512xf32>,
    return
  }
  func.func @transform_0(%arg0: i32) -> (i32, i32) {
    %c0_i32 = arith.constant 0 : i32
    %c0_i32_0 = arith.constant 0 : i32
    %c0_i32_1 = arith.constant 0 : i32
    return %c0_i32, %c0_i32_0 : i32, i32
  }
  func.func @transform_1(%arg0: i32) -> (i32, i32, i32) {
    %c0_i32 = arith.constant 0 : i32
    %c0_i32_0 = arith.constant 0 : i32
    %c0_i32_1 = arith.constant 0 : i32
    %c0_i32_2 = arith.constant 0 : i32
    return %c0_i32, %c0_i32_0, %c0_i32_1 : i32, i32, i32
  }
  func.func @transform_2(%arg0: i32) -> (i32, i32) {
    %c0_i32 = arith.constant 0 : i32
    %c0_i32_0 = arith.constant 0 : i32
    %c0_i32_1 = arith.constant 0 : i32
    return %c0_i32, %c0_i32_0 : i32, i32
  }
  func.func @transform_3(%arg0: i32) -> (i32, i32) {
    %c0_i32 = arith.constant 0 : i32
    %c0_i32_0 = arith.constant 0 : i32
    %c0_i32_1 = arith.constant 0 : i32
    return %c0_i32, %c0_i32_0 : i32, i32
  }
  func.func @transform_4(%arg0: i32) -> (i32, i32) {
    %c0_i32 = arith.constant 0 : i32
    %c0_i32_0 = arith.constant 0 : i32
    %c0_i32_1 = arith.constant 0 : i32
    return %c0_i32, %c0_i32_0 : i32, i32
  }
}

</mosaic_0001>

<llo_original>
// kernel: tpu_custom_call.1
$region0: #{tpu_custom_call.1}
  #allocation0 [shape = 'u32[]', space=smem, size = 0x4, offset = 0x4, fixed_abs, tag = 'smem constant byte address 0x4 - core index']
  #allocation1 [shape = 'u32[144,128]{1,0:T(1,128)}', space=vmem, size = 0x12000, scoped, tag = 'internal scratch']
  %s0 = inlined_call_operand.hbm [shape: bf16[16,512], index: 0, kind: input, shape index: {}]
  %s1 = inlined_call_operand.vmem [shape: bf16[4,8,16], index: 1, kind: input, shape index: {}]
  %s2 = inlined_call_operand.vmem [shape: f32[8,1], index: 2, kind: input, shape index: {}]
  %s3 = inlined_call_operand.vmem [shape: f32[8,1], index: 3, kind: input, shape index: {}]
  %s4 = inlined_call_operand.hbm [shape: f32[32,512], index: 4, kind: output, shape index: {}]
  %s5 = sld [smem:[#allocation0]]
  $region30: #{tpu_custom_call.1} parent=0
    _
  %s7 = ssub.s32 1, %s5
  %s8 = scalar_select 0, %s7, %s5
  $region1: #{tpu_custom_call.1} parent=0
    #allocation2 [shape = 'u8[16384]{0}', space=vmem, size = 0x4000, scoped, tag = 'input window, operand 0, single buffered']
    #allocation3 [shape = 's32[1]{0}', space=sflag, size = 0x4, scoped, tag = 'scoped memory for tpu_custom_call.1']
    #allocation4 [shape = 's32[1]{0}', space=sflag, size = 0x4, scoped, tag = 'scoped memory for tpu_custom_call.1']
    #allocation5 [shape = 'u8[65536]{0}', space=vmem, size = 0x10000, scoped, tag = 'output window, operand 0, single buffered']
    %9 = vsyncpa [#allocation3], 0
    %10 = vsyncpa [#allocation4], 0
    // Predicated region
    $region2: #{tpu_custom_call.1} parent=1 // pred_check
      _
    $region3: #{tpu_custom_call.1} parent=1 // pred_check_branch
      %12 = sbr.rel (0) target = $region5
    $region4: #{tpu_custom_call.1} parent=1 // pred_region
      %s14 = ssub.s32 512, 512
      %15 = vsyncadd [#allocation3], %s14
      %s16 = sshll.u32 [#allocation2], 4
      %s17 = int_to_ptr.vmem [resolvable:$true] %s16
      %22 = dma.hbm_to_vmem [thread:$0]  %s0, 512, %s17, [#allocation3], 256, 256, 16
    $region5: #{tpu_custom_call.1} parent=1 // pred_fallthru
      _
    // Predicated region
    $region6: #{tpu_custom_call.1} parent=1 // pred_check
      _
    $region7: #{tpu_custom_call.1} parent=1 // pred_check_branch
      %24 = sbr.rel (0) target = $region9
    $region8: #{tpu_custom_call.1} parent=1 // pred_region
      _
    $region9: #{tpu_custom_call.1} parent=1 // pred_fallthru
      _
    // Predicated region
    $region10: #{tpu_custom_call.1} parent=1 // pred_check
      _
    $region11: #{tpu_custom_call.1} parent=1 // pred_check_branch
      %26 = sbr.rel (0) target = $region13
    $region12: #{tpu_custom_call.1} parent=1 // pred_region
      _
    $region13: #{tpu_custom_call.1} parent=1 // pred_fallthru
      _
    // Predicated region
    $region14: #{tpu_custom_call.1} parent=1 // pred_check
      _
    $region15: #{tpu_custom_call.1} parent=1 // pred_check_branch
      %28 = sbr.rel (0) target = $region17
    $region16: #{tpu_custom_call.1} parent=1 // pred_region
      _
    $region17: #{tpu_custom_call.1} parent=1 // pred_fallthru
      _
    // Predicated region
    $region18: #{tpu_custom_call.1} parent=1 // pred_check
      _
    $region19: #{tpu_custom_call.1} parent=1 // pred_check_branch
      %30 = sbr.rel (0) target = $region21
    $region20: #{tpu_custom_call.1} parent=1 // pred_region
      %31 = dma.done [#allocation3], 512
    $region21: #{tpu_custom_call.1} parent=1 // pred_fallthru
      _
    %v33 = vld [vmem:[#allocation2] sm:$0xff]
    %v34 = vld [vmem:[#allocation2 + $0x8] sm:$0xff]
    %v35 = vld [vmem:[#allocation2 + $0x10] sm:$0xff]
    %v36 = vld [vmem:[#allocation2 + $0x18] sm:$0xff]
    %v37 = vld [vmem:[%s1] sm:$0xf]
    %v42 = vunpack.c.l.b16 %v33
    %v43 = vunpack.c.h.b16 %v33
    %v44 = vunpack.c.l.b16 %v34
    %v45 = vunpack.c.h.b16 %v34
    %v46 = vunpack.c.l.b16 %v35
    %v47 = vunpack.c.h.b16 %v35
    %v48 = vunpack.c.l.b16 %v36
    %v49 = vunpack.c.h.b16 %v36
    %v50 = vpack.c.b16 %v46, %v42
    %v51 = vpack.c.b16 %v47, %v43
    %v52 = vpack.c.b16 %v48, %v44
    %v53 = vpack.c.b16 %v49, %v45
    %vm58 = vcmask 130048
    %v60 = vsel %vm58, %v37, 0
    %62 = vmatprep.subr.bf16.mxu0 %v51
    %63 = vmatpush1.bf16.msra.mxu0 %v50
    %64 = vmatprep.subr.bf16.mxu0 0
    %65 = vmatpush1.bf16.msra.mxu0 0
    %66 = vmatprep.subr.bf16.mxu0 0
    %67 = vmatpush1.bf16.msra.mxu0 0
    %68 = vmatprep.subr.bf16.mxu0 0
    %69 = vmatpush1.bf16.msra.mxu0 0
    %70 = vmatprep.subr.bf16.mxu0 0
    %71 = vmatpush1.bf16.msra.mxu0 0
    %72 = vmatprep.subr.bf16.mxu0 0
    %73 = vmatpush1.bf16.msra.mxu0 0
    %74 = vmatprep.subr.bf16.mxu0 0
    %75 = vmatpush1.bf16.msra.mxu0 0
    %76 = vmatprep.subr.bf16.mxu0 0
    %77 = vmatpush1.bf16.msra.mxu0 0
    %78 = vmatprep.subr.bf16.mxu0 0
    %79 = vmatpush1.bf16.msra.mxu0 0
    %80 = vmatprep.subr.bf16.mxu0 0
    %81 = vmatpush1.bf16.msra.mxu0 0
    %82 = vmatprep.subr.bf16.mxu0 0
    %83 = vmatpush1.bf16.msra.mxu0 0
    %84 = vmatprep.subr.bf16.mxu0 0
    %85 = vmatpush1.bf16.msra.mxu0 0
    %86 = vmatprep.subr.bf16.mxu0 0
    %87 = vmatpush1.bf16.msra.mxu0 0
    %88 = vmatprep.subr.bf16.mxu0 0
    %89 = vmatpush1.bf16.msra.mxu0 0
    %90 = vmatprep.subr.bf16.mxu0 0
    %91 = vmatpush1.bf16.msra.mxu0 0
    %92 = vmatprep.subr.bf16.mxu0 0
    %93 = vmatpush1.bf16.msra.mxu0 0
    %94 = vmatprep.mubr.bf16.mxu0 0
    %95 = vmatmul.mubr.bf16.gmra.mrb[0].mxu0 %v60
    %v96 = vpop.f32.mrb[0].mxu0
    %v97 = vadd.f32 0.0, %v96
    %v98 = vpop.f32.mrb[0].mxu0
    %v99 = vadd.f32 0.0, %v98
    %v100 = vpop.f32.mrb[0].mxu0
    %v101 = vpop.f32.mrb[0].mxu0
    %102 = vdwg.mxu0
    %103 = vmatprep.subr.bf16.mxu0 %v53
    %104 = vmatpush1.bf16.msra.mxu0 %v52
    %105 = vmatprep.subr.bf16.mxu0 0
    %106 = vmatpush1.bf16.msra.mxu0 0
    %107 = vmatprep.subr.bf16.mxu0 0
    %108 = vmatpush1.bf16.msra.mxu0 0
    %109 = vmatprep.subr.bf16.mxu0 0
    %110 = vmatpush1.bf16.msra.mxu0 0
    %111 = vmatprep.subr.bf16.mxu0 0
    %112 = vmatpush1.bf16.msra.mxu0 0
    %113 = vmatprep.subr.bf16.mxu0 0
    %114 = vmatpush1.bf16.msra.mxu0 0
    %115 = vmatprep.subr.bf16.mxu0 0
    %116 = vmatpush1.bf16.msra.mxu0 0
    %117 = vmatprep.subr.bf16.mxu0 0
    %118 = vmatpush1.bf16.msra.mxu0 0
    %119 = vmatprep.subr.bf16.mxu0 0
    %120 = vmatpush1.bf16.msra.mxu0 0
    %121 = vmatprep.subr.bf16.mxu0 0
    %122 = vmatpush1.bf16.msra.mxu0 0
    %123 = vmatprep.subr.bf16.mxu0 0
    %124 = vmatpush1.bf16.msra.mxu0 0
    %125 = vmatprep.subr.bf16.mxu0 0
    %126 = vmatpush1.bf16.msra.mxu0 0
    %127 = vmatprep.subr.bf16.mxu0 0
    %128 = vmatpush1.bf16.msra.mxu0 0
    %129 = vmatprep.subr.bf16.mxu0 0
    %130 = vmatpush1.bf16.msra.mxu0 0
    %131 = vmatprep.subr.bf16.mxu0 0
    %132 = vmatpush1.bf16.msra.mxu0 0
    %133 = vmatprep.subr.bf16.mxu0 0
    %134 = vmatpush1.bf16.msra.mxu0 0
    %135 = vmatprep.mubr.bf16.mxu0 0
    %136 = vmatmul.mubr.bf16.gmra.mrb[0].mxu0 %v60
    %v137 = vpop.f32.mrb[0].mxu0
    %v138 = vadd.f32 0.0, %v137
    %v139 = vpop.f32.mrb[0].mxu0
    %v140 = vadd.f32 0.0, %v139
    %v141 = vpop.f32.mrb[0].mxu0
    %v142 = vpop.f32.mrb[0].mxu0
    %143 = vdwg.mxu0
    %s144 = scalar_lea.vmem %s1, 4
    %v145 = vld [vmem:[%s144] sm:$0xf]
    %v147 = vsel %vm58, %v145, 0
    %149 = vmatprep.subr.bf16.mxu0 %v51
    %150 = vmatpush1.bf16.msra.mxu0 %v50
    %151 = vmatprep.subr.bf16.mxu0 0
    %152 = vmatpush1.bf16.msra.mxu0 0
    %153 = vmatprep.subr.bf16.mxu0 0
    %154 = vmatpush1.bf16.msra.mxu0 0
    %155 = vmatprep.subr.bf16.mxu0 0
    %156 = vmatpush1.bf16.msra.mxu0 0
    %157 = vmatprep.subr.bf16.mxu0 0
    %158 = vmatpush1.bf16.msra.mxu0 0
    %159 = vmatprep.subr.bf16.mxu0 0
    %160 = vmatpush1.bf16.msra.mxu0 0
    %161 = vmatprep.subr.bf16.mxu0 0
    %162 = vmatpush1.bf16.msra.mxu0 0
    %163 = vmatprep.subr.bf16.mxu0 0
    %164 = vmatpush1.bf16.msra.mxu0 0
    %165 = vmatprep.subr.bf16.mxu0 0
    %166 = vmatpush1.bf16.msra.mxu0 0
    %167 = vmatprep.subr.bf16.mxu0 0
    %168 = vmatpush1.bf16.msra.mxu0 0
    %169 = vmatprep.subr.bf16.mxu0 0
    %170 = vmatpush1.bf16.msra.mxu0 0
    %171 = vmatprep.subr.bf16.mxu0 0
    %172 = vmatpush1.bf16.msra.mxu0 0
    %173 = vmatprep.subr.bf16.mxu0 0
    %174 = vmatpush1.bf16.msra.mxu0 0
    %175 = vmatprep.subr.bf16.mxu0 0
    %176 = vmatpush1.bf16.msra.mxu0 0
    %177 = vmatprep.subr.bf16.mxu0 0
    %178 = vmatpush1.bf16.msra.mxu0 0
    %179 = vmatprep.subr.bf16.mxu0 0
    %180 = vmatpush1.bf16.msra.mxu0 0
    %181 = vmatprep.mubr.bf16.mxu0 0
    %182 = vmatmul.mubr.bf16.gmra.mrb[0].mxu0 %v147
    %v183 = vpop.f32.mrb[0].mxu0
    %v184 = vadd.f32 0.0, %v183
    %v185 = vpop.f32.mrb[0].mxu0
    %v186 = vadd.f32 0.0, %v185
    %v187 = vpop.f32.mrb[0].mxu0
    %v188 = vpop.f32.mrb[0].mxu0
    %189 = vdwg.mxu0
    %190 = vmatprep.subr.bf16.mxu0 %v53
    %191 = vmatpush1.bf16.msra.mxu0 %v52
    %192 = vmatprep.subr.bf16.mxu0 0
    %193 = vmatpush1.bf16.msra.mxu0 0
    %194 = vmatprep.subr.bf16.mxu0 0
    %195 = vmatpush1.bf16.msra.mxu0 0
    %196 = vmatprep.subr.bf16.mxu0 0
    %197 = vmatpush1.bf16.msra.mxu0 0
    %198 = vmatprep.subr.bf16.mxu0 0
    %199 = vmatpush1.bf16.msra.mxu0 0
    %200 = vmatprep.subr.bf16.mxu0 0
    %201 = vmatpush1.bf16.msra.mxu0 0
    %202 = vmatprep.subr.bf16.mxu0 0
    %203 = vmatpush1.bf16.msra.mxu0 0
    %204 = vmatprep.subr.bf16.mxu0 0
    %205 = vmatpush1.bf16.msra.mxu0 0
    %206 = vmatprep.subr.bf16.mxu0 0
    %207 = vmatpush1.bf16.msra.mxu0 0
    %208 = vmatprep.subr.bf16.mxu0 0
    %209 = vmatpush1.bf16.msra.mxu0 0
    %210 = vmatprep.subr.bf16.mxu0 0
    %211 = vmatpush1.bf16.msra.mxu0 0
    %212 = vmatprep.subr.bf16.mxu0 0
    %213 = vmatpush1.bf16.msra.mxu0 0
    %214 = vmatprep.subr.bf16.mxu0 0
    %215 = vmatpush1.bf16.msra.mxu0 0
    %216 = vmatprep.subr.bf16.mxu0 0
    %217 = vmatpush1.bf16.msra.mxu0 0
    %218 = vmatprep.subr.bf16.mxu0 0
    %219 = vmatpush1.bf16.msra.mxu0 0
    %220 = vmatprep.subr.bf16.mxu0 0
    %221 = vmatpush1.bf16.msra.mxu0 0
    %222 = vmatprep.mubr.bf16.mxu0 0
    %223 = vmatmul.mubr.bf16.gmra.mrb[0].mxu0 %v147
    %v224 = vpop.f32.mrb[0].mxu0
    %v225 = vadd.f32 0.0, %v224
    %v226 = vpop.f32.mrb[0].mxu0
    %v227 = vadd.f32 0.0, %v226
    %v228 = vpop.f32.mrb[0].mxu0
    %v229 = vpop.f32.mrb[0].mxu0
    %230 = vdwg.mxu0
    %s231 = scalar_lea.vmem %s1, 8
    %v232 = vld [vmem:[%s231] sm:$0xf]
    %v234 = vsel %vm58, %v232, 0
    %236 = vmatprep.subr.bf16.mxu0 %v51
    %237 = vmatpush1.bf16.msra.mxu0 %v50
    %238 = vmatprep.subr.bf16.mxu0 0
    %239 = vmatpush1.bf16.msra.mxu0 0
    %240 = vmatprep.subr.bf16.mxu0 0
    %241 = vmatpush1.bf16.msra.mxu0 0
    %242 = vmatprep.subr.bf16.mxu0 0
    %243 = vmatpush1.bf16.msra.mxu0 0
    %244 = vmatprep.subr.bf16.mxu0 0
    %245 = vmatpush1.bf16.msra.mxu0 0
    %246 = vmatprep.subr.bf16.mxu0 0
    %247 = vmatpush1.bf16.msra.mxu0 0
    %248 = vmatprep.subr.bf16.mxu0 0
    %249 = vmatpush1.bf16.msra.mxu0 0
    %250 = vmatprep.subr.bf16.mxu0 0
    %251 = vmatpush1.bf16.msra.mxu0 0
    %252 = vmatprep.subr.bf16.mxu0 0
    %253 = vmatpush1.bf16.msra.mxu0 0
    %254 = vmatprep.subr.bf16.mxu0 0
    %255 = vmatpush1.bf16.msra.mxu0 0
    %256 = vmatprep.subr.bf16.mxu0 0
    %257 = vmatpush1.bf16.msra.mxu0 0
    %258 = vmatprep.subr.bf16.mxu0 0
    %259 = vmatpush1.bf16.msra.mxu0 0
    %260 = vmatprep.subr.bf16.mxu0 0
    %261 = vmatpush1.bf16.msra.mxu0 0
    %262 = vmatprep.subr.bf16.mxu0 0
    %263 = vmatpush1.bf16.msra.mxu0 0
    %264 = vmatprep.subr.bf16.mxu0 0
    %265 = vmatpush1.bf16.msra.mxu0 0
    %266 = vmatprep.subr.bf16.mxu0 0
    %267 = vmatpush1.bf16.msra.mxu0 0
    %268 = vmatprep.mubr.bf16.mxu0 0
    %269 = vmatmul.mubr.bf16.gmra.mrb[0].mxu0 %v234
    %v270 = vpop.f32.mrb[0].mxu0
    %v271 = vadd.f32 0.0, %v270
    %v272 = vpop.f32.mrb[0].mxu0
    %v273 = vadd.f32 0.0, %v272
    %v274 = vpop.f32.mrb[0].mxu0
    %v275 = vpop.f32.mrb[0].mxu0
    %276 = vdwg.mxu0
    %277 = vmatprep.subr.bf16.mxu0 %v53
    %278 = vmatpush1.bf16.msra.mxu0 %v52
    %279 = vmatprep.subr.bf16.mxu0 0
    %280 = vmatpush1.bf16.msra.mxu0 0
    %281 = vmatprep.subr.bf16.mxu0 0
    %282 = vmatpush1.bf16.msra.mxu0 0
    %283 = vmatprep.subr.bf16.mxu0 0
    %284 = vmatpush1.bf16.msra.mxu0 0
    %285 = vmatprep.subr.bf16.mxu0 0
    %286 = vmatpush1.bf16.msra.mxu0 0
    %287 = vmatprep.subr.bf16.mxu0 0
    %288 = vmatpush1.bf16.msra.mxu0 0
    %289 = vmatprep.subr.bf16.mxu0 0
    %290 = vmatpush1.bf16.msra.mxu0 0
    %291 = vmatprep.subr.bf16.mxu0 0
    %292 = vmatpush1.bf16.msra.mxu0 0
    %293 = vmatprep.subr.bf16.mxu0 0
    %294 = vmatpush1.bf16.msra.mxu0 0
    %295 = vmatprep.subr.bf16.mxu0 0
    %296 = vmatpush1.bf16.msra.mxu0 0
    %297 = vmatprep.subr.bf16.mxu0 0
    %298 = vmatpush1.bf16.msra.mxu0 0
    %299 = vmatprep.subr.bf16.mxu0 0
    %300 = vmatpush1.bf16.msra.mxu0 0
    %301 = vmatprep.subr.bf16.mxu0 0
    %302 = vmatpush1.bf16.msra.mxu0 0
    %303 = vmatprep.subr.bf16.mxu0 0
    %304 = vmatpush1.bf16.msra.mxu0 0
    %305 = vmatprep.subr.bf16.mxu0 0
    %306 = vmatpush1.bf16.msra.mxu0 0
    %307 = vmatprep.subr.bf16.mxu0 0
    %308 = vmatpush1.bf16.msra.mxu0 0
    %309 = vmatprep.mubr.bf16.mxu0 0
    %310 = vmatmul.mubr.bf16.gmra.mrb[0].mxu0 %v234
    %v311 = vpop.f32.mrb[0].mxu0
    %v312 = vadd.f32 0.0, %v311
    %v313 = vpop.f32.mrb[0].mxu0
    %v314 = vadd.f32 0.0, %v313
    %v315 = vpop.f32.mrb[0].mxu0
    %v316 = vpop.f32.mrb[0].mxu0
    %317 = vdwg.mxu0
    %s318 = scalar_lea.vmem %s1, 12
    %v319 = vld [vmem:[%s318] sm:$0xf]
    %v321 = vsel %vm58, %v319, 0
    %323 = vmatprep.subr.bf16.mxu0 %v51
    %324 = vmatpush1.bf16.msra.mxu0 %v50
    %325 = vmatprep.subr.bf16.mxu0 0
    %326 = vmatpush1.bf16.msra.mxu0 0
    %327 = vmatprep.subr.bf16.mxu0 0
    %328 = vmatpush1.bf16.msra.mxu0 0
    %329 = vmatprep.subr.bf16.mxu0 0
    %330 = vmatpush1.bf16.msra.mxu0 0
    %331 = vmatprep.subr.bf16.mxu0 0
    %332 = vmatpush1.bf16.msra.mxu0 0
    %333 = vmatprep.subr.bf16.mxu0 0
    %334 = vmatpush1.bf16.msra.mxu0 0
    %335 = vmatprep.subr.bf16.mxu0 0
    %336 = vmatpush1.bf16.msra.mxu0 0
    %337 = vmatprep.subr.bf16.mxu0 0
    %338 = vmatpush1.bf16.msra.mxu0 0
    %339 = vmatprep.subr.bf16.mxu0 0
    %340 = vmatpush1.bf16.msra.mxu0 0
    %341 = vmatprep.subr.bf16.mxu0 0
    %342 = vmatpush1.bf16.msra.mxu0 0
    %343 = vmatprep.subr.bf16.mxu0 0
    %344 = vmatpush1.bf16.msra.mxu0 0
    %345 = vmatprep.subr.bf16.mxu0 0
    %346 = vmatpush1.bf16.msra.mxu0 0
    %347 = vmatprep.subr.bf16.mxu0 0
    %348 = vmatpush1.bf16.msra.mxu0 0
    %349 = vmatprep.subr.bf16.mxu0 0
    %350 = vmatpush1.bf16.msra.mxu0 0
    %351 = vmatprep.subr.bf16.mxu0 0
    %352 = vmatpush1.bf16.msra.mxu0 0
    %353 = vmatprep.subr.bf16.mxu0 0
    %354 = vmatpush1.bf16.msra.mxu0 0
    %355 = vmatprep.mubr.bf16.mxu0 0
    %356 = vmatmul.mubr.bf16.gmra.mrb[0].mxu0 %v321
    %v357 = vpop.f32.mrb[0].mxu0
    %v358 = vadd.f32 0.0, %v357
    %v359 = vpop.f32.mrb[0].mxu0
    %v360 = vadd.f32 0.0, %v359
    %v361 = vpop.f32.mrb[0].mxu0
    %v362 = vpop.f32.mrb[0].mxu0
    %363 = vdwg.mxu0
    %364 = vmatprep.subr.bf16.mxu0 %v53
    %365 = vmatpush1.bf16.msra.mxu0 %v52
    %366 = vmatprep.subr.bf16.mxu0 0
    %367 = vmatpush1.bf16.msra.mxu0 0
    %368 = vmatprep.subr.bf16.mxu0 0
    %369 = vmatpush1.bf16.msra.mxu0 0
    %370 = vmatprep.subr.bf16.mxu0 0
    %371 = vmatpush1.bf16.msra.mxu0 0
    %372 = vmatprep.subr.bf16.mxu0 0
    %373 = vmatpush1.bf16.msra.mxu0 0
    %374 = vmatprep.subr.bf16.mxu0 0
    %375 = vmatpush1.bf16.msra.mxu0 0
    %376 = vmatprep.subr.bf16.mxu0 0
    %377 = vmatpush1.bf16.msra.mxu0 0
    %378 = vmatprep.subr.bf16.mxu0 0
    %379 = vmatpush1.bf16.msra.mxu0 0
    %380 = vmatprep.subr.bf16.mxu0 0
    %381 = vmatpush1.bf16.msra.mxu0 0
    %382 = vmatprep.subr.bf16.mxu0 0
    %383 = vmatpush1.bf16.msra.mxu0 0
    %384 = vmatprep.subr.bf16.mxu0 0
    %385 = vmatpush1.bf16.msra.mxu0 0
    %386 = vmatprep.subr.bf16.mxu0 0
    %387 = vmatpush1.bf16.msra.mxu0 0
    %388 = vmatprep.subr.bf16.mxu0 0
    %389 = vmatpush1.bf16.msra.mxu0 0
    %390 = vmatprep.subr.bf16.mxu0 0
    %391 = vmatpush1.bf16.msra.mxu0 0
    %392 = vmatprep.subr.bf16.mxu0 0
    %393 = vmatpush1.bf16.msra.mxu0 0
    %394 = vmatprep.subr.bf16.mxu0 0
    %395 = vmatpush1.bf16.msra.mxu0 0
    %396 = vmatprep.mubr.bf16.mxu0 0
    %397 = vmatmul.mubr.bf16.gmra.mrb[0].mxu0 %v321
    %v398 = vpop.f32.mrb[0].mxu0
    %v399 = vadd.f32 0.0, %v398
    %v400 = vpop.f32.mrb[0].mxu0
    %v401 = vadd.f32 0.0, %v400
    %v402 = vpop.f32.mrb[0].mxu0
    %v403 = vpop.f32.mrb[0].mxu0
    %404 = vdwg.mxu0
    %v405 = vadd.f32 %v97, %v99
    %v406 = vadd.f32 %v405, %v138
    %v407 = vadd.f32 %v406, %v140
    %408 = vadd.xlane.f32.xlu0 %v407
    %v409 = vpop.xlane.xlu0 %408
    %v410 = vadd.f32 %v409, 0.0
    %v411 = vmul.f32 %v97, %v97
    %v412 = vmul.f32 %v99, %v99
    %v413 = vmul.f32 %v138, %v138
    %v414 = vmul.f32 %v140, %v140
    %v415 = vadd.f32 %v411, %v412
    %v416 = vadd.f32 %v415, %v413
    %v417 = vadd.f32 %v416, %v414
    %418 = vadd.xlane.f32.xlu0 %v417
    %v419 = vpop.xlane.xlu0 %418
    %v420 = vadd.f32 %v419, 0.0
    %v421 = vadd.f32 %v184, %v186
    %v422 = vadd.f32 %v421, %v225
    %v423 = vadd.f32 %v422, %v227
    %424 = vadd.xlane.f32.xlu0 %v423
    %v425 = vpop.xlane.xlu0 %424
    %v426 = vadd.f32 %v410, %v425
    %v427 = vmul.f32 %v184, %v184
    %v428 = vmul.f32 %v186, %v186
    %v429 = vmul.f32 %v225, %v225
    %v430 = vmul.f32 %v227, %v227
    %v431 = vadd.f32 %v427, %v428
    %v432 = vadd.f32 %v431, %v429
    %v433 = vadd.f32 %v432, %v430
    %434 = vadd.xlane.f32.xlu0 %v433
    %v435 = vpop.xlane.xlu0 %434
    %v436 = vadd.f32 %v420, %v435
    %v437 = vadd.f32 %v271, %v273
    %v438 = vadd.f32 %v437, %v312
    %v439 = vadd.f32 %v438, %v314
    %440 = vadd.xlane.f32.xlu0 %v439
    %v441 = vpop.xlane.xlu0 %440
    %v442 = vadd.f32 %v426, %v441
    %v443 = vmul.f32 %v271, %v271
    %v444 = vmul.f32 %v273, %v273
    %v445 = vmul.f32 %v312, %v312
    %v446 = vmul.f32 %v314, %v314
    %v447 = vadd.f32 %v443, %v444
    %v448 = vadd.f32 %v447, %v445
    %v449 = vadd.f32 %v448, %v446
    %450 = vadd.xlane.f32.xlu0 %v449
    %v451 = vpop.xlane.xlu0 %450
    %v452 = vadd.f32 %v436, %v451
    %v453 = vadd.f32 %v358, %v360
    %v454 = vadd.f32 %v453, %v399
    %v455 = vadd.f32 %v454, %v401
    %456 = vadd.xlane.f32.xlu0 %v455
    %v457 = vpop.xlane.xlu0 %456
    %v458 = vadd.f32 %v442, %v457
    %v459 = vmul.f32 %v358, %v358
    %v460 = vmul.f32 %v360, %v360
    %v461 = vmul.f32 %v399, %v399
    %v462 = vmul.f32 %v401, %v401
    %v463 = vadd.f32 %v459, %v460
    %v464 = vadd.f32 %v463, %v461
    %v465 = vadd.f32 %v464, %v462
    %466 = vadd.xlane.f32.xlu0 %v465
    %v467 = vpop.xlane.xlu0 %466
    %v468 = vadd.f32 %v452, %v467
    %v469 = vmul.f32 %v458, 0.00048828125
    %v470 = vmul.f32 %v468, 0.00048828125
    %v471 = vmul.f32 %v469, %v469
    %v472 = vsub.f32 %v470, %v471
    %v473 = vmax.f32 %v472, 0.0
    %v474 = vld [vmem:[%s2] sm:$0xff]
    %v475 = vadd.f32 %v473, 1e-05
    %v476 = vrsqrt.pop %v475
    %v477 = vmul.f32 %v474, %v476
    %v478 = vld [vmem:[%s3] sm:$0xff]
    %v479 = vmul.f32 %v469, %v477
    %v480 = vsub.f32 %v478, %v479
    %482 = vset.pattern.permute.xlu0 0
    %483 = vperm.xlu0 %482, %v477
    %v484 = vpop.permute.xlu0 %483
    %v486 = vmul.f32 %v97, %v484
    %v487 = vmul.f32 %v99, %v484
    %v488 = vmul.f32 %v138, %v484
    %v489 = vmul.f32 %v140, %v484
    %491 = vset.pattern.permute.xlu0 0
    %492 = vperm.xlu0 %491, %v480
    %v493 = vpop.permute.xlu0 %492
    %v495 = vadd.f32 %v486, %v493
    %v496 = vadd.f32 %v487, %v493
    %v497 = vadd.f32 %v488, %v493
    %v498 = vadd.f32 %v489, %v493
    %vm499 = vcmp.ge.f32.partialorder %v495, 0.0
    %vm500 = vcmp.ge.f32.partialorder %v496, 0.0
    %vm501 = vcmp.ge.f32.partialorder %v497, 0.0
    %vm502 = vcmp.ge.f32.partialorder %v498, 0.0
    %v503 = vmul.f32 %v495, 0.01
    %v504 = vmul.f32 %v496, 0.01
    %v505 = vmul.f32 %v497, 0.01
    %v506 = vmul.f32 %v498, 0.01
    %v507 = vsel %vm499, %v495, %v503
    %v508 = vsel %vm500, %v496, %v504
    %v509 = vsel %vm501, %v497, %v505
    %v510 = vsel %vm502, %v498, %v506
    %511 = vst [vmem:[#allocation5] sm:$0xff] %v507
    %512 = vst [vmem:[#allocation5 + $0x8] sm:$0xff] %v508
    %513 = vst [vmem:[#allocation5 + $0x10] sm:$0xff] %v509
    %514 = vst [vmem:[#allocation5 + $0x18] sm:$0xff] %v510
    %v515 = vmul.f32 %v184, %v484
    %v516 = vmul.f32 %v186, %v484
    %v517 = vmul.f32 %v225, %v484
    %v518 = vmul.f32 %v227, %v484
    %v519 = vadd.f32 %v515, %v493
    %v520 = vadd.f32 %v516, %v493
    %v521 = vadd.f32 %v517, %v493
    %v522 = vadd.f32 %v518, %v493
    %vm523 = vcmp.ge.f32.partialorder %v519, 0.0
    %vm524 = vcmp.ge.f32.partialorder %v520, 0.0
    %vm525 = vcmp.ge.f32.partialorder %v521, 0.0
    %vm526 = vcmp.ge.f32.partialorder %v522, 0.0
    %v527 = vmul.f32 %v519, 0.01
    %v528 = vmul.f32 %v520, 0.01
    %v529 = vmul.f32 %v521, 0.01
    %v530 = vmul.f32 %v522, 0.01
    %v531 = vsel %vm523, %v519, %v527
    %v532 = vsel %vm524, %v520, %v528
    %v533 = vsel %vm525, %v521, %v529
    %v534 = vsel %vm526, %v522, %v530
    %535 = vst [vmem:[#allocation5 + $0x20] sm:$0xff] %v531
    %536 = vst [vmem:[#allocation5 + $0x28] sm:$0xff] %v532
    %537 = vst [vmem:[#allocation5 + $0x30] sm:$0xff] %v533
    %538 = vst [vmem:[#allocation5 + $0x38] sm:$0xff] %v534
    %v539 = vmul.f32 %v271, %v484
    %v540 = vmul.f32 %v273, %v484
    %v541 = vmul.f32 %v312, %v484
    %v542 = vmul.f32 %v314, %v484
    %v543 = vadd.f32 %v539, %v493
    %v544 = vadd.f32 %v540, %v493
    %v545 = vadd.f32 %v541, %v493
    %v546 = vadd.f32 %v542, %v493
    %vm547 = vcmp.ge.f32.partialorder %v543, 0.0
    %vm548 = vcmp.ge.f32.partialorder %v544, 0.0
    %vm549 = vcmp.ge.f32.partialorder %v545, 0.0
    %vm550 = vcmp.ge.f32.partialorder %v546, 0.0
    %v551 = vmul.f32 %v543, 0.01
    %v552 = vmul.f32 %v544, 0.01
    %v553 = vmul.f32 %v545, 0.01
    %v554 = vmul.f32 %v546, 0.01
    %v555 = vsel %vm547, %v543, %v551
    %v556 = vsel %vm548, %v544, %v552
    %v557 = vsel %vm549, %v545, %v553
    %v558 = vsel %vm550, %v546, %v554
    %559 = vst [vmem:[#allocation5 + $0x40] sm:$0xff] %v555
    %560 = vst [vmem:[#allocation5 + $0x48] sm:$0xff] %v556
    %561 = vst [vmem:[#allocation5 + $0x50] sm:$0xff] %v557
    %562 = vst [vmem:[#allocation5 + $0x58] sm:$0xff] %v558
    %v563 = vmul.f32 %v358, %v484
    %v564 = vmul.f32 %v360, %v484
    %v565 = vmul.f32 %v399, %v484
    %v566 = vmul.f32 %v401, %v484
    %v567 = vadd.f32 %v563, %v493
    %v568 = vadd.f32 %v564, %v493
    %v569 = vadd.f32 %v565, %v493
    %v570 = vadd.f32 %v566, %v493
    %vm571 = vcmp.ge.f32.partialorder %v567, 0.0
    %vm572 = vcmp.ge.f32.partialorder %v568, 0.0
    %vm573 = vcmp.ge.f32.partialorder %v569, 0.0
    %vm574 = vcmp.ge.f32.partialorder %v570, 0.0
    %v575 = vmul.f32 %v567, 0.01
    %v576 = vmul.f32 %v568, 0.01
    %v577 = vmul.f32 %v569, 0.01
    %v578 = vmul.f32 %v570, 0.01
    %v579 = vsel %vm571, %v567, %v575
    %v580 = vsel %vm572, %v568, %v576
    %v581 = vsel %vm573, %v569, %v577
    %v582 = vsel %vm574, %v570, %v578
    %583 = vst [vmem:[#allocation5 + $0x60] sm:$0xff] %v579
    %584 = vst [vmem:[#allocation5 + $0x68] sm:$0xff] %v580
    %585 = vst [vmem:[#allocation5 + $0x70] sm:$0xff] %v581
    %586 = vst [vmem:[#allocation5 + $0x78] sm:$0xff] %v582
    // Predicated region
    $region22: #{tpu_custom_call.1} parent=1 // pred_check
      _
    $region23: #{tpu_custom_call.1} parent=1 // pred_check_branch
      %588 = sbr.rel (0) target = $region25
    $region24: #{tpu_custom_call.1} parent=1 // pred_region
      %s590 = ssub.s32 2048, 2048
      %591 = vsyncadd [#allocation4], %s590
      %s592 = sshll.u32 [#allocation5], 4
      %s593 = int_to_ptr.vmem [resolvable:$true] %s592
      %598 = dma.vmem_to_hbm [thread:$0]  %s593, 2048, %s4, [#allocation4], 512, 512, 32
    $region25: #{tpu_custom_call.1} parent=1 // pred_fallthru
      _
    // Predicated region
    $region26: #{tpu_custom_call.1} parent=1 // pred_check
      _
    $region27: #{tpu_custom_call.1} parent=1 // pred_check_branch
      %600 = sbr.rel (0) target = $region29
    $region28: #{tpu_custom_call.1} parent=1 // pred_region
      %601 = dma.done [#allocation4], 2048
    $region29: #{tpu_custom_call.1} parent=1 // pred_fallthru
      _
    %602 = vsyncpa [#allocation3], 1
    %603 = vsyncpa [#allocation4], 1

</llo_original>
